<compile_context>
chip_gen: v7x
topology: tpu7x:2x2x1
jax: 0.10.0
libtpu: 0.0.40
codegen_flags: <defaults>
</compile_context>

<pallas_src>
import jax
import jax.numpy as jnp
from jax.experimental import pallas as pl
from jax.experimental.pallas import tpu as pltpu


INPUT_CH = 3
HIDDEN_DIM = 64
GEO_FEAT_DIM = 15
OUT_DIM = 1 + GEO_FEAT_DIM  # 16


def _sdf_mlp_kernel(x_ref, w1t_ref, w2t_ref, o_ref):
    # x_ref:   (tn, INPUT_CH)          native points block (batch on sublanes)
    # w1t_ref: (INPUT_CH, HIDDEN_DIM)  f32 layer-1 weight, pre-transposed
    # w2t_ref: (HIDDEN_DIM, out_cols)  layer-2 weight (only col 0 if SDF-only)
    # o_ref:   (tn, out_cols)          native output block
    xf = x_ref[...].astype(jnp.float32)
    w1f = w1t_ref[...]

    # Layer 1 on the VPU: INPUT_CH broadcast FMAs, f32 math (v5e-safe).
    h = xf[:, 0:1] * w1f[0:1, :]
    for c in range(1, INPUT_CH):
        h = h + xf[:, c:c + 1] * w1f[c:c + 1, :]
    h = jnp.maximum(h, 0.0)  # ReLU in f32

    # Layer 2 on the MXU: stationary weight, f32 accumulation.
    out = jnp.dot(h.astype(w2t_ref.dtype), w2t_ref[...],
                  preferred_element_type=jnp.float32)
    o_ref[...] = out.astype(o_ref.dtype)


def _round_up(x, m):
    return ((x + m - 1) // m) * m


def sdf_net_forward(x, w1, w2, *, return_geo=True, tn=8192,
                    compute_dtype=None, vmem_limit_bytes=48 * 1024 * 1024):
    """Forward pass of SDFNet (bias-free 2-layer MLP).

    x:  (N, 3) query points -- always read at their own (f32) precision.
    w1: (64, 3), w2: (16, 64)  -- torch nn.Linear(bias=False) weight layout.
    return_geo: True -> (N, 16); False -> (N, 1) (only the SDF row is written).
    tn: batch tile (multiple of 256).  Default 8192; sweep to ~16384 on v7x,
        32768+ on v5e/v6e (raise vmem_limit_bytes to ~100 MiB there).
    compute_dtype: e.g. jnp.bfloat16 (recommended on all gens) -- used for the
        layer-2 MXU operands and the output store; accumulation stays f32.
    """
    N, in_ch = x.shape
    assert in_ch == INPUT_CH
    assert w1.shape == (HIDDEN_DIM, INPUT_CH)
    assert w2.shape == (OUT_DIM, HIDDEN_DIM)
    assert tn % 256 == 0, "tn must be a multiple of 256"

    cdt = compute_dtype if compute_dtype is not None else x.dtype

    # Tiny weight relayouts (192 / 1024 elements -- negligible): pre-transpose
    # so the kernel needs no in-kernel weight transposes, and pass only the
    # SDF row of W2 when geometry features are not requested.
    w1t = w1.T.astype(jnp.float32)              # (3, 64)
    w2_use = w2 if return_geo else w2[:1]       # (16, 64) or (1, 64)
    w2t = w2_use.T.astype(cdt)                  # (64, out_cols)
    out_cols = w2t.shape[1]

    # Clamp the batch tile: (a) no oversized VMEM buffers for small N,
    # (b) >= ~4 grid steps when N allows so both v7x TensorCores get work.
    tn_eff = min(tn, max(256, _round_up(-(-N // 4), 256)))
    grid = (pl.cdiv(N, tn_eff),)

    out = pl.pallas_call(
        _sdf_mlp_kernel,
        out_shape=jax.ShapeDtypeStruct((N, out_cols), cdt),
        grid_spec=pltpu.PrefetchScalarGridSpec(
            num_scalar_prefetch=0,
            grid=grid,
            in_specs=[
                pl.BlockSpec((tn_eff, INPUT_CH), lambda i: (i, 0)),
                pl.BlockSpec((INPUT_CH, HIDDEN_DIM), lambda i: (0, 0)),
                pl.BlockSpec((HIDDEN_DIM, out_cols), lambda i: (0, 0)),
            ],
            out_specs=pl.BlockSpec((tn_eff, out_cols), lambda i: (i, 0)),
        ),
        compiler_params=pltpu.CompilerParams(
            dimension_semantics=("parallel",),
            vmem_limit_bytes=vmem_limit_bytes,
        ),
    )(x, w1t, w2t)
    return out


def init_params(key):
    """Deterministic synthetic init mimicking nn.Linear(bias=False)."""
    k1, k2 = jax.random.split(key)
    b1 = 1.0 / jnp.sqrt(INPUT_CH)
    b2 = 1.0 / jnp.sqrt(HIDDEN_DIM)
    w1 = jax.random.uniform(k1, (HIDDEN_DIM, INPUT_CH), jnp.float32, -b1, b1)
    w2 = jax.random.uniform(k2, (OUT_DIM, HIDDEN_DIM), jnp.float32, -b2, b2)
    return w1, w2  # torch layout


def _reference(x, w1, w2):
    h = jnp.maximum(x @ w1.T, 0.0)
    return h @ w2.T


if __name__ == "__main__":
    key = jax.random.PRNGKey(0)
    kx, kp = jax.random.split(key)

    # Small test shapes; N deliberately NOT a multiple of the tile so the
    # ragged-tail (block-clipping) path is exercised.
    N = 300
    x = jax.random.normal(kx, (N, INPUT_CH), dtype=jnp.float32)
    w1, w2 = init_params(kp)
    ref = _reference(x, w1, w2)

    # f32, full geometry-feature output.
    out = jax.block_until_ready(sdf_net_forward(x, w1, w2, return_geo=True))
    assert out.shape == (N, OUT_DIM)
    assert jnp.allclose(out, ref, atol=1e-4, rtol=1e-4)

    # SDF-value-only path (only the SDF column is computed and written).
    sdf_only = jax.block_until_ready(sdf_net_forward(x, w1, w2, return_geo=False))
    assert sdf_only.shape == (N, 1)
    assert jnp.allclose(sdf_only, ref[:, :1], atol=1e-4, rtol=1e-4)

    # bf16 output / MXU operands (recommended on all generations); x stays f32
    # and all accumulation is f32.
    out_bf16 = jax.block_until_ready(
        sdf_net_forward(x, w1, w2, return_geo=True, compute_dtype=jnp.bfloat16)
    )
    assert out_bf16.shape == (N, OUT_DIM)
    assert jnp.allclose(out_bf16.astype(jnp.float32), ref, atol=5e-2, rtol=5e-2)

    print("KERNEL_OK")
</pallas_src>

<mosaic_0001>
module attributes {stable_mosaic.version = 11 : i64} {
  func.func @_sdf_mlp_kernel(%arg0: i32, %arg1: memref<256x3xf32, #tpu.memory_space<vmem>>, %arg2: memref<3x64xf32, #tpu.memory_space<vmem>>, %arg3: memref<64x16xf32, #tpu.memory_space<vmem>>, %arg4: memref<256x16xf32, #tpu.memory_space<vmem>>) attributes {dimension_semantics = [#tpu.dimension_semantics<parallel>], iteration_bounds = array<i64: 2>, scalar_prefetch = 0 : i64, scratch_operands = 0 : i64, tpu.core_type = #tpu.core_type<tc>, window_params = [{transform_indices = @transform_0, window_bounds = array<i64: 256, 3>}, {pipeline_mode = #tpu.pipeline_mode<synchronous>, transform_indices = @transform_1, window_bounds = array<i64: 3, 64>}, {pipeline_mode = #tpu.pipeline_mode<synchronous>, transform_indices = @transform_2, window_bounds = array<i64: 64, 16>}, {transform_indices = @transform_3, window_bounds = array<i64: 256, 16>}]} {
    %c0 = arith.constant 0 : index
    %c0_0 = arith.constant 0 : index
    %0 = vector.load %arg1[%c0, %c0_0] : memref<256x3xf32, #tpu.memory_space<vmem>>, vector<256x3xf32>
    %c0_1 = arith.constant 0 : index
    %c0_2 = arith.constant 0 : index
    %1 = vector.load %arg2[%c0_1, %c0_2] : memref<3x64xf32, #tpu.memory_space<vmem>>, vector<3x64xf32>
    %2 = vector.extract_strided_slice %0 {offsets = [0, 0], sizes = [256, 1], strides = [1, 1]} : vector<256x3xf32> to vector<256x1xf32>
    %3 = vector.extract_strided_slice %1 {offsets = [0, 0], sizes = [1, 64], strides = [1, 1]} : vector<3x64xf32> to vector<1x64xf32>
    %4 = vector.broadcast %2 : vector<256x1xf32> to vector<256x64xf32>
    %5 = vector.broadcast %3 : vector<1x64xf32> to vector<256x64xf32>
    %6 = arith.mulf %4, %5 : vector<256x64xf32>
    %7 = vector.extract_strided_slice %0 {offsets = [0, 1], sizes = [256, 1], strides = [1, 1]} : vector<256x3xf32> to vector<256x1xf32>
    %8 = vector.extract_strided_slice %1 {offsets = [1, 0], sizes = [1, 64], strides = [1, 1]} : vector<3x64xf32> to vector<1x64xf32>
    %9 = vector.broadcast %7 : vector<256x1xf32> to vector<256x64xf32>
    %10 = vector.broadcast %8 : vector<1x64xf32> to vector<256x64xf32>
    %11 = arith.mulf %9, %10 : vector<256x64xf32>
    %12 = arith.addf %6, %11 : vector<256x64xf32>
    %13 = vector.extract_strided_slice %0 {offsets = [0, 2], sizes = [256, 1], strides = [1, 1]} : vector<256x3xf32> to vector<256x1xf32>
    %14 = vector.extract_strided_slice %1 {offsets = [2, 0], sizes = [1, 64], strides = [1, 1]} : vector<3x64xf32> to vector<1x64xf32>
    %15 = vector.broadcast %13 : vector<256x1xf32> to vector<256x64xf32>
    %16 = vector.broadcast %14 : vector<1x64xf32> to vector<256x64xf32>
    %17 = arith.mulf %15, %16 : vector<256x64xf32>
    %18 = arith.addf %12, %17 : vector<256x64xf32>
    %cst = arith.constant 0.000000e+00 : f32
    %19 = vector.broadcast %cst : f32 to vector<256x64xf32>
    %20 = arith.maximumf %18, %19 : vector<256x64xf32>
    %c0_3 = arith.constant 0 : index
    %c0_4 = arith.constant 0 : index
    %21 = vector.load %arg3[%c0_3, %c0_4] : memref<64x16xf32, #tpu.memory_space<vmem>>, vector<64x16xf32>
    %cst_5 = arith.constant dense<0.000000e+00> : vector<256x16xf32>
    %22 = tpu.matmul %20, %21, %cst_5 {dimension_numbers = #tpu.dot_dimension_numbers<[1], [0], [0], [1], [0, 0, 1, 1], [], []>} : vector<256x64xf32>, vector<64x16xf32>, vector<256x16xf32> -> vector<256x16xf32>
    %c0_6 = arith.constant 0 : index
    %c0_7 = arith.constant 0 : index
    %23 = vector.load %arg4[%c0_6, %c0_7] : memref<256x16xf32, #tpu.memory_space<vmem>>, vector<256x16xf32>
    tpu.vector_store %arg4[%c0_6, %c0_7], %22 {strides = array<i32>} : memref<256x16xf32, #tpu.memory_space<vmem>>, vector<256x16xf32>,
    return
  }
  func.func @transform_0(%arg0: i32) -> (i32, i32) {
    %c0_i32 = arith.constant 0 : i32
    %c0_i32_0 = arith.constant 0 : i32
    return %arg0, %c0_i32 : i32, i32
  }
  func.func @transform_1(%arg0: i32) -> (i32, i32) {
    %c0_i32 = arith.constant 0 : i32
    %c0_i32_0 = arith.constant 0 : i32
    %c0_i32_1 = arith.constant 0 : i32
    return %c0_i32, %c0_i32_0 : i32, i32
  }
  func.func @transform_2(%arg0: i32) -> (i32, i32) {
    %c0_i32 = arith.constant 0 : i32
    %c0_i32_0 = arith.constant 0 : i32
    %c0_i32_1 = arith.constant 0 : i32
    return %c0_i32, %c0_i32_0 : i32, i32
  }
  func.func @transform_3(%arg0: i32) -> (i32, i32) {
    %c0_i32 = arith.constant 0 : i32
    %c0_i32_0 = arith.constant 0 : i32
    return %arg0, %c0_i32 : i32, i32
  }
}

</mosaic_0001>

<llo_original>
// kernel: tpu_custom_call.1
$region0: #{tpu_custom_call.1}
  #allocation0 [shape = 'u32[]', space=smem, size = 0x4, offset = 0x4, fixed_abs, tag = 'smem constant byte address 0x4 - core index']
  #allocation1 [shape = 'u32[144,128]{1,0:T(1,128)}', space=vmem, size = 0x12000, scoped, tag = 'internal scratch']
  %s0 = inlined_call_operand.vmem [shape: f32[300,3], index: 0, kind: input, shape index: {}]
  %s1 = inlined_call_operand.vmem [shape: f32[3,64], index: 1, kind: input, shape index: {}]
  %s2 = inlined_call_operand.vmem [shape: f32[64,16], index: 2, kind: input, shape index: {}]
  %s3 = inlined_call_operand.vmem [shape: f32[300,16], index: 3, kind: output, shape index: {}]
  %s4 = sld [smem:[#allocation0]]
  $region93: #{tpu_custom_call.1} parent=0
    _
  %s6 = ssub.s32 1, %s4
  %s7 = scalar_select 0, %s6, %s4
  $region1: #{tpu_custom_call.1} parent=0
    #allocation2 [shape = 'u8[262144]{0}', space=vmem, size = 0x40000, scoped, tag = 'output window, operand 0']
    loop: start=0, step=1, limit=4
    $region2: #{tpu_custom_call.1} parent=1 // loop_pre_header
      _
    $region3: #{tpu_custom_call.1} parent=1 // loop_header
      %s9 = sphi 0, %s13
      %p10 = scmp.ge.s32.totalorder %s9, 4
      %s19 = sphi 0, %s21
      %s22 = sphi 0, %s19
      %s23 = sphi 0, %s22
      %s39 = sphi 0, %s23
      %s43 = sphi 0, %s43
      %s45 = sphi 0, %s43
      %s46 = sphi 0, %s45
      %s60 = sphi 0, %s46
      %s64 = sphi 0, %s64
      %s66 = sphi 0, %s64
      %s67 = sphi 0, %s66
      %s81 = sphi 0, %s67
      %s87 = sphi 0, %s89
      %s90 = sphi 0, %s87
      %s91 = sphi 0, %s90
      %s107 = sphi 0, %s91
    $region4: #{tpu_custom_call.1} parent=1 // loop_header_branch
      %12 = sbr.rel (%p10) target = $region8
    $region5: #{tpu_custom_call.1} parent=1 // loop_body
      %s14 = ssub.s32 %s9, 1
      %s15 = ssub.s32 %s9, 2
      %s16 = sadd.s32 %s9, 1
      %s17 = ssub.s32 %s9, %s16
      %p18 = scmp.eq.s32.totalorder %s17, 0
      %s20 = sadd.s32 %s19, 1
      %s21 = scalar_select %p18, %s19, %s20
      %p24 = pneg %p18
      %p25 = scmp.eq.s32.totalorder %s9, 1
      %p26 = por %p24, %p25
      %p27 = scmp.ne.s32.totalorder %s19, %s22
      %p28 = scmp.eq.s32.totalorder %s9, 0
      %p29 = por %p27, %p28
      %p30 = scmp.ne.s32.totalorder %s19, %s22
      %p31 = scmp.eq.s32.totalorder %s14, 1
      %p32 = por %p30, %p31
      %p33 = scmp.ne.s32.totalorder %s22, %s23
      %p34 = scmp.eq.s32.totalorder %s14, 0
      %p35 = por %p33, %p34
      %p36 = scmp.ne.s32.totalorder %s22, %s23
      %p37 = scmp.eq.s32.totalorder %s15, 1
      %p38 = por %p36, %p37
      %p40 = scmp.ne.s32.totalorder %s23, %s39
      %p41 = scmp.eq.s32.totalorder %s15, 0
      %p42 = por %p40, %p41
      %s44 = sadd.s32 %s43, 1
      %p47 = scmp.eq.s32.totalorder %s9, 1
      %p48 = scmp.ne.s32.totalorder %s43, %s45
      %p49 = scmp.eq.s32.totalorder %s9, 0
      %p50 = por %p48, %p49
      %p51 = scmp.ne.s32.totalorder %s43, %s45
      %p52 = scmp.eq.s32.totalorder %s14, 1
      %p53 = por %p51, %p52
      %p54 = scmp.ne.s32.totalorder %s45, %s46
      %p55 = scmp.eq.s32.totalorder %s14, 0
      %p56 = por %p54, %p55
      %p57 = scmp.ne.s32.totalorder %s45, %s46
      %p58 = scmp.eq.s32.totalorder %s15, 1
      %p59 = por %p57, %p58
      %p61 = scmp.ne.s32.totalorder %s46, %s60
      %p62 = scmp.eq.s32.totalorder %s15, 0
      %p63 = por %p61, %p62
      %s65 = sadd.s32 %s64, 1
      %p68 = scmp.eq.s32.totalorder %s9, 1
      %p69 = scmp.ne.s32.totalorder %s64, %s66
      %p70 = scmp.eq.s32.totalorder %s9, 0
      %p71 = por %p69, %p70
      %p72 = scmp.ne.s32.totalorder %s64, %s66
      %p73 = scmp.eq.s32.totalorder %s14, 1
      %p74 = por %p72, %p73
      %p75 = scmp.ne.s32.totalorder %s66, %s67
      %p76 = scmp.eq.s32.totalorder %s14, 0
      %p77 = por %p75, %p76
      %p78 = scmp.ne.s32.totalorder %s66, %s67
      %p79 = scmp.eq.s32.totalorder %s15, 1
      %p80 = por %p78, %p79
      %p82 = scmp.ne.s32.totalorder %s67, %s81
      %p83 = scmp.eq.s32.totalorder %s15, 0
      %p84 = por %p82, %p83
      %s85 = ssub.s32 %s9, %s16
      %p86 = scmp.eq.s32.totalorder %s85, 0
      %s88 = sadd.s32 %s87, 1
      %s89 = scalar_select %p86, %s87, %s88
      %p92 = pneg %p86
      %p93 = scmp.eq.s32.totalorder %s9, 1
      %p94 = por %p92, %p93
      %p95 = scmp.ne.s32.totalorder %s87, %s90
      %p96 = scmp.eq.s32.totalorder %s9, 0
      %p97 = por %p95, %p96
      %p98 = scmp.ne.s32.totalorder %s87, %s90
      %p99 = scmp.eq.s32.totalorder %s14, 1
      %p100 = por %p98, %p99
      %p101 = scmp.ne.s32.totalorder %s90, %s91
      %p102 = scmp.eq.s32.totalorder %s14, 0
      %p103 = por %p101, %p102
      %p104 = scmp.ne.s32.totalorder %s90, %s91
      %p105 = scmp.eq.s32.totalorder %s15, 1
      %p106 = por %p104, %p105
      %p108 = scmp.ne.s32.totalorder %s91, %s107
      %p109 = scmp.eq.s32.totalorder %s15, 0
      %p110 = por %p108, %p109
      %p111 = scmp.le.s32.totalorder 1, %s9
      %p112 = scmp.lt.s32.totalorder %s9, 3
      %p113 = pnand %p111, %p112
      %p114 = pneg %p113
      // Predicated region
      $region9: #{tpu_custom_call.1} parent=5 // pred_check
        _
      $region10: #{tpu_custom_call.1} parent=5 // pred_check_branch
        %116 = sbr.rel (%p113) target = $region12
      $region11: #{tpu_custom_call.1} parent=5 // pred_region
        %s117 = ssub.s32 %s9, 1
        // Predicated region
        $region13: #{tpu_custom_call.1} parent=11 // pred_check
          %p118 = pneg %p56
        $region14: #{tpu_custom_call.1} parent=11 // pred_check_branch
          %120 = sbr.rel (%p118) target = $region16
        $region15: #{tpu_custom_call.1} parent=11 // pred_region
          _
        $region16: #{tpu_custom_call.1} parent=11 // pred_fallthru
          _
        // Predicated region
        $region17: #{tpu_custom_call.1} parent=11 // pred_check
          %p121 = pneg %p77
        $region18: #{tpu_custom_call.1} parent=11 // pred_check_branch
          %123 = sbr.rel (%p121) target = $region20
        $region19: #{tpu_custom_call.1} parent=11 // pred_region
          _
        $region20: #{tpu_custom_call.1} parent=11 // pred_fallthru
          _
      $region12: #{tpu_custom_call.1} parent=5 // pred_fallthru
        _
      %p124 = scmp.lt.s32.totalorder %s9, 2
      // Predicated region
      $region21: #{tpu_custom_call.1} parent=5 // pred_check
        %p125 = pneg %p124
      $region22: #{tpu_custom_call.1} parent=5 // pred_check_branch
        %127 = sbr.rel (%p125) target = $region24
      $region23: #{tpu_custom_call.1} parent=5 // pred_region
        // Predicated region
        $region25: #{tpu_custom_call.1} parent=23 // pred_check
          %p128 = pneg %p29
        $region26: #{tpu_custom_call.1} parent=23 // pred_check_branch
          %130 = sbr.rel (%p128) target = $region28
        $region27: #{tpu_custom_call.1} parent=23 // pred_region
          %s131 = smul.u32 32, %s9
          %s132 = ssub.s32 38, %s131
          %p133 = scmp.lt.s32.totalorder %s132, 32
          %s134 = scalar_select %p133, %s132, 32
          %s135 = smul.u32 128, %s134
          %p136 = scmp.lt.s32.totalorder %s131, 37
          %s137 = scalar_select %p136, %s131, 37
          %s138 = smul.addr %s137, 8
          %s139 = scalar_lea.vmem %s0, %s138
          %s140 = smul.u32 32, %s9
          %s141 = ssub.s32 38, %s140
          %p142 = scmp.lt.s32.totalorder %s141, 32
          %s143 = scalar_select %p142, %s141, 32
          %s144 = smul.u32 128, %s143
        $region28: #{tpu_custom_call.1} parent=23 // pred_fallthru
          _
      $region24: #{tpu_custom_call.1} parent=5 // pred_fallthru
        _
      %p145 = scmp.le.s32.totalorder 1, %s9
      %p146 = scmp.lt.s32.totalorder %s9, 3
      %p147 = pnand %p145, %p146
      %p148 = pneg %p147
      // Predicated region
      $region29: #{tpu_custom_call.1} parent=5 // pred_check
        _
      $region30: #{tpu_custom_call.1} parent=5 // pred_check_branch
        %150 = sbr.rel (%p147) target = $region32
      $region31: #{tpu_custom_call.1} parent=5 // pred_region
        %s151 = ssub.s32 %s9, 1
        %s152 = smul.u32 32, %s14
        %s153 = ssub.s32 38, %s152
        %p154 = scmp.lt.s32.totalorder %s153, 32
        %s155 = scalar_select %p154, %s153, 32
        %s156 = smul.u32 128, %s155
        %p157 = scmp.lt.s32.totalorder %s152, 37
        %s158 = scalar_select %p157, %s152, 37
        %s159 = smul.addr %s158, 8
        %s160 = scalar_lea.vmem %s0, %s159
        %p161 = pneg %p35
        %p162 = pneg %p32
        %p163 = pneg %p56
        %p164 = pneg %p53
        %p165 = pneg %p77
        %p166 = pneg %p74
        %p167 = pneg %p103
        %p168 = pneg %p100
        %s169 = sand.u32 %s90, 1
        %s170 = sand.u32 %s90, 1
        %s171 = smul.addr %s170, 256
        %s172 = scalar_lea.vmem [#allocation2], %s171
        %s173 = smul.u32 32, %s14
        %s174 = ssub.s32 38, %s173
        %p175 = scmp.lt.s32.totalorder %s174, 32
        %s176 = scalar_select %p175, %s174, 32
        %s177 = smul.u32 128, %s176
        %p178 = scmp.lt.s32.totalorder %s173, 37
        %s179 = scalar_select %p178, %s173, 37
        %s180 = smul.addr %s179, 8
        %s181 = scalar_lea.vmem %s0, %s180
        %s182 = smul.u32 32, %s14
        %s183 = ssub.s32 38, %s182
        %p184 = scmp.lt.s32.totalorder %s183, 32
        %s185 = scalar_select %p184, %s183, 32
        %s186 = smul.u32 128, %s185
        %s187 = smul.u32 32, %s14
        %s188 = ssub.s32 38, %s187
        %p189 = scmp.lt.s32.totalorder %s188, 32
        %s190 = scalar_select %p189, %s188, 32
        %s191 = smul.u32 128, %s190
        %v192 = vld [vmem:[%s181] sm:$0xff]
        %v193 = vld [vmem:[%s181 + $0x8] sm:$0xff]
        %v194 = vld [vmem:[%s181 + $0x10] sm:$0xff]
        %v195 = vld [vmem:[%s181 + $0x18] sm:$0xff]
        %v196 = vld [vmem:[%s181 + $0x20] sm:$0xff]
        %v197 = vld [vmem:[%s181 + $0x28] sm:$0xff]
        %v198 = vld [vmem:[%s181 + $0x30] sm:$0xff]
        %v199 = vld [vmem:[%s181 + $0x38] sm:$0xff]
        %v200 = vld [vmem:[%s181 + $0x40] sm:$0xff]
        %v201 = vld [vmem:[%s181 + $0x48] sm:$0xff]
        %v202 = vld [vmem:[%s181 + $0x50] sm:$0xff]
        %v203 = vld [vmem:[%s181 + $0x58] sm:$0xff]
        %v204 = vld [vmem:[%s181 + $0x60] sm:$0xff]
        %v205 = vld [vmem:[%s181 + $0x68] sm:$0xff]
        %v206 = vld [vmem:[%s181 + $0x70] sm:$0xff]
        %v207 = vld [vmem:[%s181 + $0x78] sm:$0xff]
        %v208 = vld [vmem:[%s181 + $0x80] sm:$0xff]
        %v209 = vld [vmem:[%s181 + $0x88] sm:$0xff]
        %v210 = vld [vmem:[%s181 + $0x90] sm:$0xff]
        %v211 = vld [vmem:[%s181 + $0x98] sm:$0xff]
        %v212 = vld [vmem:[%s181 + $0xa0] sm:$0xff]
        %v213 = vld [vmem:[%s181 + $0xa8] sm:$0xff]
        %v214 = vld [vmem:[%s181 + $0xb0] sm:$0xff]
        %v215 = vld [vmem:[%s181 + $0xb8] sm:$0xff]
        %v216 = vld [vmem:[%s181 + $0xc0] sm:$0xff]
        %v217 = vld [vmem:[%s181 + $0xc8] sm:$0xff]
        %v218 = vld [vmem:[%s181 + $0xd0] sm:$0xff]
        %v219 = vld [vmem:[%s181 + $0xd8] sm:$0xff]
        %v220 = vld [vmem:[%s181 + $0xe0] sm:$0xff]
        %v221 = vld [vmem:[%s181 + $0xe8] sm:$0xff]
        %v222 = vld [vmem:[%s181 + $0xf0] sm:$0xff]
        %v223 = vld [vmem:[%s181 + $0xf8] sm:$0xff]
        %v224 = vld [vmem:[%s1] sm:$0x7]
        %226 = vset.pattern.permute.xlu0 0
        %227 = vperm.xlu0 %226, %v192
        %v228 = vpop.permute.xlu0 %227
        %231 = vset.pattern.permute.xlu0 0
        %232 = vperm.xlu0 %231, %v193
        %v233 = vpop.permute.xlu0 %232
        %236 = vset.pattern.permute.xlu0 0
        %237 = vperm.xlu0 %236, %v194
        %v238 = vpop.permute.xlu0 %237
        %241 = vset.pattern.permute.xlu0 0
        %242 = vperm.xlu0 %241, %v195
        %v243 = vpop.permute.xlu0 %242
        %246 = vset.pattern.permute.xlu0 0
        %247 = vperm.xlu0 %246, %v196
        %v248 = vpop.permute.xlu0 %247
        %251 = vset.pattern.permute.xlu0 0
        %252 = vperm.xlu0 %251, %v197
        %v253 = vpop.permute.xlu0 %252
        %256 = vset.pattern.permute.xlu0 0
        %257 = vperm.xlu0 %256, %v198
        %v258 = vpop.permute.xlu0 %257
        %261 = vset.pattern.permute.xlu0 0
        %262 = vperm.xlu0 %261, %v199
        %v263 = vpop.permute.xlu0 %262
        %266 = vset.pattern.permute.xlu0 0
        %267 = vperm.xlu0 %266, %v200
        %v268 = vpop.permute.xlu0 %267
        %271 = vset.pattern.permute.xlu0 0
        %272 = vperm.xlu0 %271, %v201
        %v273 = vpop.permute.xlu0 %272
        %276 = vset.pattern.permute.xlu0 0
        %277 = vperm.xlu0 %276, %v202
        %v278 = vpop.permute.xlu0 %277
        %281 = vset.pattern.permute.xlu0 0
        %282 = vperm.xlu0 %281, %v203
        %v283 = vpop.permute.xlu0 %282
        %286 = vset.pattern.permute.xlu0 0
        %287 = vperm.xlu0 %286, %v204
        %v288 = vpop.permute.xlu0 %287
        %291 = vset.pattern.permute.xlu0 0
        %292 = vperm.xlu0 %291, %v205
        %v293 = vpop.permute.xlu0 %292
        %296 = vset.pattern.permute.xlu0 0
        %297 = vperm.xlu0 %296, %v206
        %v298 = vpop.permute.xlu0 %297
        %301 = vset.pattern.permute.xlu0 0
        %302 = vperm.xlu0 %301, %v207
        %v303 = vpop.permute.xlu0 %302
        %306 = vset.pattern.permute.xlu0 0
        %307 = vperm.xlu0 %306, %v208
        %v308 = vpop.permute.xlu0 %307
        %311 = vset.pattern.permute.xlu0 0
        %312 = vperm.xlu0 %311, %v209
        %v313 = vpop.permute.xlu0 %312
        %316 = vset.pattern.permute.xlu0 0
        %317 = vperm.xlu0 %316, %v210
        %v318 = vpop.permute.xlu0 %317
        %321 = vset.pattern.permute.xlu0 0
        %322 = vperm.xlu0 %321, %v211
        %v323 = vpop.permute.xlu0 %322
        %326 = vset.pattern.permute.xlu0 0
        %327 = vperm.xlu0 %326, %v212
        %v328 = vpop.permute.xlu0 %327
        %331 = vset.pattern.permute.xlu0 0
        %332 = vperm.xlu0 %331, %v213
        %v333 = vpop.permute.xlu0 %332
        %336 = vset.pattern.permute.xlu0 0
        %337 = vperm.xlu0 %336, %v214
        %v338 = vpop.permute.xlu0 %337
        %341 = vset.pattern.permute.xlu0 0
        %342 = vperm.xlu0 %341, %v215
        %v343 = vpop.permute.xlu0 %342
        %346 = vset.pattern.permute.xlu0 0
        %347 = vperm.xlu0 %346, %v216
        %v348 = vpop.permute.xlu0 %347
        %351 = vset.pattern.permute.xlu0 0
        %352 = vperm.xlu0 %351, %v217
        %v353 = vpop.permute.xlu0 %352
        %356 = vset.pattern.permute.xlu0 0
        %357 = vperm.xlu0 %356, %v218
        %v358 = vpop.permute.xlu0 %357
        %361 = vset.pattern.permute.xlu0 0
        %362 = vperm.xlu0 %361, %v219
        %v363 = vpop.permute.xlu0 %362
        %366 = vset.pattern.permute.xlu0 0
        %367 = vperm.xlu0 %366, %v220
        %v368 = vpop.permute.xlu0 %367
        %371 = vset.pattern.permute.xlu0 0
        %372 = vperm.xlu0 %371, %v221
        %v373 = vpop.permute.xlu0 %372
        %376 = vset.pattern.permute.xlu0 0
        %377 = vperm.xlu0 %376, %v222
        %v378 = vpop.permute.xlu0 %377
        %381 = vset.pattern.permute.xlu0 0
        %382 = vperm.xlu0 %381, %v223
        %v383 = vpop.permute.xlu0 %382
        %v385 = vlaneseq
        %v386 = vshrl.u32 %v385, 7
        %v387 = vsub.s32 0, %v386
        %v388 = vrot.slane %v224, %v387
        %v389 = vmul.f32 %v228, %v388
        %v390 = vmul.f32 %v233, %v388
        %v391 = vmul.f32 %v238, %v388
        %v392 = vmul.f32 %v243, %v388
        %v393 = vmul.f32 %v248, %v388
        %v394 = vmul.f32 %v253, %v388
        %v395 = vmul.f32 %v258, %v388
        %v396 = vmul.f32 %v263, %v388
        %v397 = vmul.f32 %v268, %v388
        %v398 = vmul.f32 %v273, %v388
        %v399 = vmul.f32 %v278, %v388
        %v400 = vmul.f32 %v283, %v388
        %v401 = vmul.f32 %v288, %v388
        %v402 = vmul.f32 %v293, %v388
        %v403 = vmul.f32 %v298, %v388
        %v404 = vmul.f32 %v303, %v388
        %v405 = vmul.f32 %v308, %v388
        %v406 = vmul.f32 %v313, %v388
        %v407 = vmul.f32 %v318, %v388
        %v408 = vmul.f32 %v323, %v388
        %v409 = vmul.f32 %v328, %v388
        %v410 = vmul.f32 %v333, %v388
        %v411 = vmul.f32 %v338, %v388
        %v412 = vmul.f32 %v343, %v388
        %v413 = vmul.f32 %v348, %v388
        %v414 = vmul.f32 %v353, %v388
        %v415 = vmul.f32 %v358, %v388
        %v416 = vmul.f32 %v363, %v388
        %v417 = vmul.f32 %v368, %v388
        %v418 = vmul.f32 %v373, %v388
        %v419 = vmul.f32 %v378, %v388
        %v420 = vmul.f32 %v383, %v388
        %421 = vset.pattern.permute.xlu0 1
        %422 = vperm.xlu0 %421, %v192
        %v423 = vpop.permute.xlu0 %422
        %425 = vset.pattern.permute.xlu0 1
        %426 = vperm.xlu0 %425, %v193
        %v427 = vpop.permute.xlu0 %426
        %429 = vset.pattern.permute.xlu0 1
        %430 = vperm.xlu0 %429, %v194
        %v431 = vpop.permute.xlu0 %430
        %433 = vset.pattern.permute.xlu0 1
        %434 = vperm.xlu0 %433, %v195
        %v435 = vpop.permute.xlu0 %434
        %437 = vset.pattern.permute.xlu0 1
        %438 = vperm.xlu0 %437, %v196
        %v439 = vpop.permute.xlu0 %438
        %441 = vset.pattern.permute.xlu0 1
        %442 = vperm.xlu0 %441, %v197
        %v443 = vpop.permute.xlu0 %442
        %445 = vset.pattern.permute.xlu0 1
        %446 = vperm.xlu0 %445, %v198
        %v447 = vpop.permute.xlu0 %446
        %449 = vset.pattern.permute.xlu0 1
        %450 = vperm.xlu0 %449, %v199
        %v451 = vpop.permute.xlu0 %450
        %453 = vset.pattern.permute.xlu0 1
        %454 = vperm.xlu0 %453, %v200
        %v455 = vpop.permute.xlu0 %454
        %457 = vset.pattern.permute.xlu0 1
        %458 = vperm.xlu0 %457, %v201
        %v459 = vpop.permute.xlu0 %458
        %461 = vset.pattern.permute.xlu0 1
        %462 = vperm.xlu0 %461, %v202
        %v463 = vpop.permute.xlu0 %462
        %465 = vset.pattern.permute.xlu0 1
        %466 = vperm.xlu0 %465, %v203
        %v467 = vpop.permute.xlu0 %466
        %469 = vset.pattern.permute.xlu0 1
        %470 = vperm.xlu0 %469, %v204
        %v471 = vpop.permute.xlu0 %470
        %473 = vset.pattern.permute.xlu0 1
        %474 = vperm.xlu0 %473, %v205
        %v475 = vpop.permute.xlu0 %474
        %477 = vset.pattern.permute.xlu0 1
        %478 = vperm.xlu0 %477, %v206
        %v479 = vpop.permute.xlu0 %478
        %481 = vset.pattern.permute.xlu0 1
        %482 = vperm.xlu0 %481, %v207
        %v483 = vpop.permute.xlu0 %482
        %485 = vset.pattern.permute.xlu0 1
        %486 = vperm.xlu0 %485, %v208
        %v487 = vpop.permute.xlu0 %486
        %489 = vset.pattern.permute.xlu0 1
        %490 = vperm.xlu0 %489, %v209
        %v491 = vpop.permute.xlu0 %490
        %493 = vset.pattern.permute.xlu0 1
        %494 = vperm.xlu0 %493, %v210
        %v495 = vpop.permute.xlu0 %494
        %497 = vset.pattern.permute.xlu0 1
        %498 = vperm.xlu0 %497, %v211
        %v499 = vpop.permute.xlu0 %498
        %501 = vset.pattern.permute.xlu0 1
        %502 = vperm.xlu0 %501, %v212
        %v503 = vpop.permute.xlu0 %502
        %505 = vset.pattern.permute.xlu0 1
        %506 = vperm.xlu0 %505, %v213
        %v507 = vpop.permute.xlu0 %506
        %509 = vset.pattern.permute.xlu0 1
        %510 = vperm.xlu0 %509, %v214
        %v511 = vpop.permute.xlu0 %510
        %513 = vset.pattern.permute.xlu0 1
        %514 = vperm.xlu0 %513, %v215
        %v515 = vpop.permute.xlu0 %514
        %517 = vset.pattern.permute.xlu0 1
        %518 = vperm.xlu0 %517, %v216
        %v519 = vpop.permute.xlu0 %518
        %521 = vset.pattern.permute.xlu0 1
        %522 = vperm.xlu0 %521, %v217
        %v523 = vpop.permute.xlu0 %522
        %525 = vset.pattern.permute.xlu0 1
        %526 = vperm.xlu0 %525, %v218
        %v527 = vpop.permute.xlu0 %526
        %529 = vset.pattern.permute.xlu0 1
        %530 = vperm.xlu0 %529, %v219
        %v531 = vpop.permute.xlu0 %530
        %533 = vset.pattern.permute.xlu0 1
        %534 = vperm.xlu0 %533, %v220
        %v535 = vpop.permute.xlu0 %534
        %537 = vset.pattern.permute.xlu0 1
        %538 = vperm.xlu0 %537, %v221
        %v539 = vpop.permute.xlu0 %538
        %541 = vset.pattern.permute.xlu0 1
        %542 = vperm.xlu0 %541, %v222
        %v543 = vpop.permute.xlu0 %542
        %545 = vset.pattern.permute.xlu0 1
        %546 = vperm.xlu0 %545, %v223
        %v547 = vpop.permute.xlu0 %546
        %v549 = vlaneseq
        %v550 = vshrl.u32 %v549, 7
        %v551 = vsub.s32 1, %v550
        %v552 = vrot.slane %v224, %v551
        %v553 = vmul.f32 %v423, %v552
        %v554 = vmul.f32 %v427, %v552
        %v555 = vmul.f32 %v431, %v552
        %v556 = vmul.f32 %v435, %v552
        %v557 = vmul.f32 %v439, %v552
        %v558 = vmul.f32 %v443, %v552
        %v559 = vmul.f32 %v447, %v552
        %v560 = vmul.f32 %v451, %v552
        %v561 = vmul.f32 %v455, %v552
        %v562 = vmul.f32 %v459, %v552
        %v563 = vmul.f32 %v463, %v552
        %v564 = vmul.f32 %v467, %v552
        %v565 = vmul.f32 %v471, %v552
        %v566 = vmul.f32 %v475, %v552
        %v567 = vmul.f32 %v479, %v552
        %v568 = vmul.f32 %v483, %v552
        %v569 = vmul.f32 %v487, %v552
        %v570 = vmul.f32 %v491, %v552
        %v571 = vmul.f32 %v495, %v552
        %v572 = vmul.f32 %v499, %v552
        %v573 = vmul.f32 %v503, %v552
        %v574 = vmul.f32 %v507, %v552
        %v575 = vmul.f32 %v511, %v552
        %v576 = vmul.f32 %v515, %v552
        %v577 = vmul.f32 %v519, %v552
        %v578 = vmul.f32 %v523, %v552
        %v579 = vmul.f32 %v527, %v552
        %v580 = vmul.f32 %v531, %v552
        %v581 = vmul.f32 %v535, %v552
        %v582 = vmul.f32 %v539, %v552
        %v583 = vmul.f32 %v543, %v552
        %v584 = vmul.f32 %v547, %v552
        %v585 = vadd.f32 %v389, %v553
        %v586 = vadd.f32 %v390, %v554
        %v587 = vadd.f32 %v391, %v555
        %v588 = vadd.f32 %v392, %v556
        %v589 = vadd.f32 %v393, %v557
        %v590 = vadd.f32 %v394, %v558
        %v591 = vadd.f32 %v395, %v559
        %v592 = vadd.f32 %v396, %v560
        %v593 = vadd.f32 %v397, %v561
        %v594 = vadd.f32 %v398, %v562
        %v595 = vadd.f32 %v399, %v563
        %v596 = vadd.f32 %v400, %v564
        %v597 = vadd.f32 %v401, %v565
        %v598 = vadd.f32 %v402, %v566
        %v599 = vadd.f32 %v403, %v567
        %v600 = vadd.f32 %v404, %v568
        %v601 = vadd.f32 %v405, %v569
        %v602 = vadd.f32 %v406, %v570
        %v603 = vadd.f32 %v407, %v571
        %v604 = vadd.f32 %v408, %v572
        %v605 = vadd.f32 %v409, %v573
        %v606 = vadd.f32 %v410, %v574
        %v607 = vadd.f32 %v411, %v575
        %v608 = vadd.f32 %v412, %v576
        %v609 = vadd.f32 %v413, %v577
        %v610 = vadd.f32 %v414, %v578
        %v611 = vadd.f32 %v415, %v579
        %v612 = vadd.f32 %v416, %v580
        %v613 = vadd.f32 %v417, %v581
        %v614 = vadd.f32 %v418, %v582
        %v615 = vadd.f32 %v419, %v583
        %v616 = vadd.f32 %v420, %v584
        %617 = vset.pattern.permute.xlu0 2
        %618 = vperm.xlu0 %617, %v192
        %v619 = vpop.permute.xlu0 %618
        %621 = vset.pattern.permute.xlu0 2
        %622 = vperm.xlu0 %621, %v193
        %v623 = vpop.permute.xlu0 %622
        %625 = vset.pattern.permute.xlu0 2
        %626 = vperm.xlu0 %625, %v194
        %v627 = vpop.permute.xlu0 %626
        %629 = vset.pattern.permute.xlu0 2
        %630 = vperm.xlu0 %629, %v195
        %v631 = vpop.permute.xlu0 %630
        %633 = vset.pattern.permute.xlu0 2
        %634 = vperm.xlu0 %633, %v196
        %v635 = vpop.permute.xlu0 %634
        %637 = vset.pattern.permute.xlu0 2
        %638 = vperm.xlu0 %637, %v197
        %v639 = vpop.permute.xlu0 %638
        %641 = vset.pattern.permute.xlu0 2
        %642 = vperm.xlu0 %641, %v198
        %v643 = vpop.permute.xlu0 %642
        %645 = vset.pattern.permute.xlu0 2
        %646 = vperm.xlu0 %645, %v199
        %v647 = vpop.permute.xlu0 %646
        %649 = vset.pattern.permute.xlu0 2
        %650 = vperm.xlu0 %649, %v200
        %v651 = vpop.permute.xlu0 %650
        %653 = vset.pattern.permute.xlu0 2
        %654 = vperm.xlu0 %653, %v201
        %v655 = vpop.permute.xlu0 %654
        %657 = vset.pattern.permute.xlu0 2
        %658 = vperm.xlu0 %657, %v202
        %v659 = vpop.permute.xlu0 %658
        %661 = vset.pattern.permute.xlu0 2
        %662 = vperm.xlu0 %661, %v203
        %v663 = vpop.permute.xlu0 %662
        %665 = vset.pattern.permute.xlu0 2
        %666 = vperm.xlu0 %665, %v204
        %v667 = vpop.permute.xlu0 %666
        %669 = vset.pattern.permute.xlu0 2
        %670 = vperm.xlu0 %669, %v205
        %v671 = vpop.permute.xlu0 %670
        %673 = vset.pattern.permute.xlu0 2
        %674 = vperm.xlu0 %673, %v206
        %v675 = vpop.permute.xlu0 %674
        %677 = vset.pattern.permute.xlu0 2
        %678 = vperm.xlu0 %677, %v207
        %v679 = vpop.permute.xlu0 %678
        %681 = vset.pattern.permute.xlu0 2
        %682 = vperm.xlu0 %681, %v208
        %v683 = vpop.permute.xlu0 %682
        %685 = vset.pattern.permute.xlu0 2
        %686 = vperm.xlu0 %685, %v209
        %v687 = vpop.permute.xlu0 %686
        %689 = vset.pattern.permute.xlu0 2
        %690 = vperm.xlu0 %689, %v210
        %v691 = vpop.permute.xlu0 %690
        %693 = vset.pattern.permute.xlu0 2
        %694 = vperm.xlu0 %693, %v211
        %v695 = vpop.permute.xlu0 %694
        %697 = vset.pattern.permute.xlu0 2
        %698 = vperm.xlu0 %697, %v212
        %v699 = vpop.permute.xlu0 %698
        %701 = vset.pattern.permute.xlu0 2
        %702 = vperm.xlu0 %701, %v213
        %v703 = vpop.permute.xlu0 %702
        %705 = vset.pattern.permute.xlu0 2
        %706 = vperm.xlu0 %705, %v214
        %v707 = vpop.permute.xlu0 %706
        %709 = vset.pattern.permute.xlu0 2
        %710 = vperm.xlu0 %709, %v215
        %v711 = vpop.permute.xlu0 %710
        %713 = vset.pattern.permute.xlu0 2
        %714 = vperm.xlu0 %713, %v216
        %v715 = vpop.permute.xlu0 %714
        %717 = vset.pattern.permute.xlu0 2
        %718 = vperm.xlu0 %717, %v217
        %v719 = vpop.permute.xlu0 %718
        %721 = vset.pattern.permute.xlu0 2
        %722 = vperm.xlu0 %721, %v218
        %v723 = vpop.permute.xlu0 %722
        %725 = vset.pattern.permute.xlu0 2
        %726 = vperm.xlu0 %725, %v219
        %v727 = vpop.permute.xlu0 %726
        %729 = vset.pattern.permute.xlu0 2
        %730 = vperm.xlu0 %729, %v220
        %v731 = vpop.permute.xlu0 %730
        %733 = vset.pattern.permute.xlu0 2
        %734 = vperm.xlu0 %733, %v221
        %v735 = vpop.permute.xlu0 %734
        %737 = vset.pattern.permute.xlu0 2
        %738 = vperm.xlu0 %737, %v222
        %v739 = vpop.permute.xlu0 %738
        %741 = vset.pattern.permute.xlu0 2
        %742 = vperm.xlu0 %741, %v223
        %v743 = vpop.permute.xlu0 %742
        %v745 = vlaneseq
        %v746 = vshrl.u32 %v745, 7
        %v747 = vsub.s32 2, %v746
        %v748 = vrot.slane %v224, %v747
        %v749 = vmul.f32 %v619, %v748
        %v750 = vmul.f32 %v623, %v748
        %v751 = vmul.f32 %v627, %v748
        %v752 = vmul.f32 %v631, %v748
        %v753 = vmul.f32 %v635, %v748
        %v754 = vmul.f32 %v639, %v748
        %v755 = vmul.f32 %v643, %v748
        %v756 = vmul.f32 %v647, %v748
        %v757 = vmul.f32 %v651, %v748
        %v758 = vmul.f32 %v655, %v748
        %v759 = vmul.f32 %v659, %v748
        %v760 = vmul.f32 %v663, %v748
        %v761 = vmul.f32 %v667, %v748
        %v762 = vmul.f32 %v671, %v748
        %v763 = vmul.f32 %v675, %v748
        %v764 = vmul.f32 %v679, %v748
        %v765 = vmul.f32 %v683, %v748
        %v766 = vmul.f32 %v687, %v748
        %v767 = vmul.f32 %v691, %v748
        %v768 = vmul.f32 %v695, %v748
        %v769 = vmul.f32 %v699, %v748
        %v770 = vmul.f32 %v703, %v748
        %v771 = vmul.f32 %v707, %v748
        %v772 = vmul.f32 %v711, %v748
        %v773 = vmul.f32 %v715, %v748
        %v774 = vmul.f32 %v719, %v748
        %v775 = vmul.f32 %v723, %v748
        %v776 = vmul.f32 %v727, %v748
        %v777 = vmul.f32 %v731, %v748
        %v778 = vmul.f32 %v735, %v748
        %v779 = vmul.f32 %v739, %v748
        %v780 = vmul.f32 %v743, %v748
        %v781 = vadd.f32 %v585, %v749
        %v782 = vadd.f32 %v586, %v750
        %v783 = vadd.f32 %v587, %v751
        %v784 = vadd.f32 %v588, %v752
        %v785 = vadd.f32 %v589, %v753
        %v786 = vadd.f32 %v590, %v754
        %v787 = vadd.f32 %v591, %v755
        %v788 = vadd.f32 %v592, %v756
        %v789 = vadd.f32 %v593, %v757
        %v790 = vadd.f32 %v594, %v758
        %v791 = vadd.f32 %v595, %v759
        %v792 = vadd.f32 %v596, %v760
        %v793 = vadd.f32 %v597, %v761
        %v794 = vadd.f32 %v598, %v762
        %v795 = vadd.f32 %v599, %v763
        %v796 = vadd.f32 %v600, %v764
        %v797 = vadd.f32 %v601, %v765
        %v798 = vadd.f32 %v602, %v766
        %v799 = vadd.f32 %v603, %v767
        %v800 = vadd.f32 %v604, %v768
        %v801 = vadd.f32 %v605, %v769
        %v802 = vadd.f32 %v606, %v770
        %v803 = vadd.f32 %v607, %v771
        %v804 = vadd.f32 %v608, %v772
        %v805 = vadd.f32 %v609, %v773
        %v806 = vadd.f32 %v610, %v774
        %v807 = vadd.f32 %v611, %v775
        %v808 = vadd.f32 %v612, %v776
        %v809 = vadd.f32 %v613, %v777
        %v810 = vadd.f32 %v614, %v778
        %v811 = vadd.f32 %v615, %v779
        %v812 = vadd.f32 %v616, %v780
        %v813 = vmax.f32 %v781, 0.0
        %v814 = vmax.f32 %v782, 0.0
        %v815 = vmax.f32 %v783, 0.0
        %v816 = vmax.f32 %v784, 0.0
        %v817 = vmax.f32 %v785, 0.0
        %v818 = vmax.f32 %v786, 0.0
        %v819 = vmax.f32 %v787, 0.0
        %v820 = vmax.f32 %v788, 0.0
        %v821 = vmax.f32 %v789, 0.0
        %v822 = vmax.f32 %v790, 0.0
        %v823 = vmax.f32 %v791, 0.0
        %v824 = vmax.f32 %v792, 0.0
        %v825 = vmax.f32 %v793, 0.0
        %v826 = vmax.f32 %v794, 0.0
        %v827 = vmax.f32 %v795, 0.0
        %v828 = vmax.f32 %v796, 0.0
        %v829 = vmax.f32 %v797, 0.0
        %v830 = vmax.f32 %v798, 0.0
        %v831 = vmax.f32 %v799, 0.0
        %v832 = vmax.f32 %v800, 0.0
        %v833 = vmax.f32 %v801, 0.0
        %v834 = vmax.f32 %v802, 0.0
        %v835 = vmax.f32 %v803, 0.0
        %v836 = vmax.f32 %v804, 0.0
        %v837 = vmax.f32 %v805, 0.0
        %v838 = vmax.f32 %v806, 0.0
        %v839 = vmax.f32 %v807, 0.0
        %v840 = vmax.f32 %v808, 0.0
        %v841 = vmax.f32 %v809, 0.0
        %v842 = vmax.f32 %v810, 0.0
        %v843 = vmax.f32 %v811, 0.0
        %v844 = vmax.f32 %v812, 0.0
        %v845 = vld [vmem:[%s2] sm:$0xff]
        %v846 = vld [vmem:[%s2 + $0x8] sm:$0xff]
        %v847 = vld [vmem:[%s2 + $0x10] sm:$0xff]
        %v848 = vld [vmem:[%s2 + $0x18] sm:$0xff]
        %v849 = vld [vmem:[%s2 + $0x20] sm:$0xff]
        %v850 = vld [vmem:[%s2 + $0x28] sm:$0xff]
        %v851 = vld [vmem:[%s2 + $0x30] sm:$0xff]
        %v852 = vld [vmem:[%s2 + $0x38] sm:$0xff]
        %vm853 = vcmask 523264
        %v855 = vsel %vm853, %v813, 0
        %v858 = vsel %vm853, %v814, 0
        %v861 = vsel %vm853, %v815, 0
        %v864 = vsel %vm853, %v816, 0
        %v867 = vsel %vm853, %v817, 0
        %v870 = vsel %vm853, %v818, 0
        %v873 = vsel %vm853, %v819, 0
        %v876 = vsel %vm853, %v820, 0
        %v879 = vsel %vm853, %v821, 0
        %v882 = vsel %vm853, %v822, 0
        %v885 = vsel %vm853, %v823, 0
        %v888 = vsel %vm853, %v824, 0
        %v891 = vsel %vm853, %v825, 0
        %v894 = vsel %vm853, %v826, 0
        %v897 = vsel %vm853, %v827, 0
        %v900 = vsel %vm853, %v828, 0
        %v903 = vsel %vm853, %v829, 0
        %v906 = vsel %vm853, %v830, 0
        %v909 = vsel %vm853, %v831, 0
        %v912 = vsel %vm853, %v832, 0
        %v915 = vsel %vm853, %v833, 0
        %v918 = vsel %vm853, %v834, 0
        %v921 = vsel %vm853, %v835, 0
        %v924 = vsel %vm853, %v836, 0
        %v927 = vsel %vm853, %v837, 0
        %v930 = vsel %vm853, %v838, 0
        %v933 = vsel %vm853, %v839, 0
        %v936 = vsel %vm853, %v840, 0
        %v939 = vsel %vm853, %v841, 0
        %v942 = vsel %vm853, %v842, 0
        %v945 = vsel %vm853, %v843, 0
        %v948 = vsel %vm853, %v844, 0
        %950 = vmatprep.subr.mxu0 0.0
        %951 = vmatpush1.msra.mxu0 %v845
        %952 = vmatprep.subr.mxu0 0.0
        %953 = vmatpush1.msra.mxu0 %v846
        %954 = vmatprep.subr.mxu0 0.0
        %955 = vmatpush1.msra.mxu0 %v847
        %956 = vmatprep.subr.mxu0 0.0
        %957 = vmatpush1.msra.mxu0 %v848
        %958 = vmatprep.subr.mxu0 0.0
        %959 = vmatpush1.msra.mxu0 %v849
        %960 = vmatprep.subr.mxu0 0.0
        %961 = vmatpush1.msra.mxu0 %v850
        %962 = vmatprep.subr.mxu0 0.0
        %963 = vmatpush1.msra.mxu0 %v851
        %964 = vmatprep.subr.mxu0 0.0
        %965 = vmatpush1.msra.mxu0 %v852
        %966 = vmatprep.subr.mxu0 0.0
        %967 = vmatpush1.msra.mxu0 0.0
        %968 = vmatprep.subr.mxu0 0.0
        %969 = vmatpush1.msra.mxu0 0.0
        %970 = vmatprep.subr.mxu0 0.0
        %971 = vmatpush1.msra.mxu0 0.0
        %972 = vmatprep.subr.mxu0 0.0
        %973 = vmatpush1.msra.mxu0 0.0
        %974 = vmatprep.subr.mxu0 0.0
        %975 = vmatpush1.msra.mxu0 0.0
        %976 = vmatprep.subr.mxu0 0.0
        %977 = vmatpush1.msra.mxu0 0.0
        %978 = vmatprep.subr.mxu0 0.0
        %979 = vmatpush1.msra.mxu0 0.0
        %980 = vmatprep.subr.mxu0 0.0
        %981 = vmatpush1.msra.mxu0 0.0
        %982 = vmatprep.subr.mxu0 0.0
        %983 = vmatpush1.msra.mxu0 0.0
        %984 = vmatprep.subr.mxu0 0.0
        %985 = vmatpush1.msra.mxu0 0.0
        %986 = vmatprep.subr.mxu0 0.0
        %987 = vmatpush1.msra.mxu0 0.0
        %988 = vmatprep.subr.mxu0 0.0
        %989 = vmatpush1.msra.mxu0 0.0
        %990 = vmatprep.subr.mxu0 0.0
        %991 = vmatpush1.msra.mxu0 0.0
        %992 = vmatprep.subr.mxu0 0.0
        %993 = vmatpush1.msra.mxu0 0.0
        %994 = vmatprep.subr.mxu0 0.0
        %995 = vmatpush1.msra.mxu0 0.0
        %996 = vmatprep.subr.mxu0 0.0
        %997 = vmatpush1.msra.mxu0 0.0
        %998 = vmatprep.subr.mxu0 0.0
        %999 = vmatpush1.msra.mxu0 0.0
        %1000 = vmatprep.subr.mxu0 0.0
        %1001 = vmatpush1.msra.mxu0 0.0
        %1002 = vmatprep.subr.mxu0 0.0
        %1003 = vmatpush1.msra.mxu0 0.0
        %1004 = vmatprep.subr.mxu0 0.0
        %1005 = vmatpush1.msra.mxu0 0.0
        %1006 = vmatprep.subr.mxu0 0.0
        %1007 = vmatpush1.msra.mxu0 0.0
        %1008 = vmatprep.subr.mxu0 0.0
        %1009 = vmatpush1.msra.mxu0 0.0
        %1010 = vmatprep.subr.mxu0 0.0
        %1011 = vmatpush1.msra.mxu0 0.0
        %1012 = vmatprep.subr.mxu0 0.0
        %1013 = vmatpush1.msra.mxu0 0.0
        %1014 = vmatprep.mubr.f32.mxu0 0.0
        %1015 = vmatmul.mubr.f32.gmra.mrb[0].mxu0 %v855
        %v1016 = vpop.f32.mrb[0].mxu0
        %v1017 = vadd.f32 0.0, %v1016
        %v1018 = vpop.f32.mrb[0].mxu0
        %1019 = vmatprep.mubr.f32.mxu0 0.0
        %1020 = vmatmul.mubr.f32.gmra.mrb[0].mxu0 %v858
        %v1021 = vpop.f32.mrb[0].mxu0
        %v1022 = vadd.f32 0.0, %v1021
        %v1023 = vpop.f32.mrb[0].mxu0
        %1024 = vmatprep.mubr.f32.mxu0 0.0
        %1025 = vmatmul.mubr.f32.gmra.mrb[0].mxu0 %v861
        %v1026 = vpop.f32.mrb[0].mxu0
        %v1027 = vadd.f32 0.0, %v1026
        %v1028 = vpop.f32.mrb[0].mxu0
        %1029 = vmatprep.mubr.f32.mxu0 0.0
        %1030 = vmatmul.mubr.f32.gmra.mrb[0].mxu0 %v864
        %v1031 = vpop.f32.mrb[0].mxu0
        %v1032 = vadd.f32 0.0, %v1031
        %v1033 = vpop.f32.mrb[0].mxu0
        %1034 = vmatprep.mubr.f32.mxu0 0.0
        %1035 = vmatmul.mubr.f32.gmra.mrb[0].mxu0 %v867
        %v1036 = vpop.f32.mrb[0].mxu0
        %v1037 = vadd.f32 0.0, %v1036
        %v1038 = vpop.f32.mrb[0].mxu0
        %1039 = vmatprep.mubr.f32.mxu0 0.0
        %1040 = vmatmul.mubr.f32.gmra.mrb[0].mxu0 %v870
        %v1041 = vpop.f32.mrb[0].mxu0
        %v1042 = vadd.f32 0.0, %v1041
        %v1043 = vpop.f32.mrb[0].mxu0
        %1044 = vmatprep.mubr.f32.mxu0 0.0
        %1045 = vmatmul.mubr.f32.gmra.mrb[0].mxu0 %v873
        %v1046 = vpop.f32.mrb[0].mxu0
        %v1047 = vadd.f32 0.0, %v1046
        %v1048 = vpop.f32.mrb[0].mxu0
        %1049 = vmatprep.mubr.f32.mxu0 0.0
        %1050 = vmatmul.mubr.f32.gmra.mrb[0].mxu0 %v876
        %v1051 = vpop.f32.mrb[0].mxu0
        %v1052 = vadd.f32 0.0, %v1051
        %v1053 = vpop.f32.mrb[0].mxu0
        %1054 = vmatprep.mubr.f32.mxu0 0.0
        %1055 = vmatmul.mubr.f32.gmra.mrb[0].mxu0 %v879
        %v1056 = vpop.f32.mrb[0].mxu0
        %v1057 = vadd.f32 0.0, %v1056
        %v1058 = vpop.f32.mrb[0].mxu0
        %1059 = vmatprep.mubr.f32.mxu0 0.0
        %1060 = vmatmul.mubr.f32.gmra.mrb[0].mxu0 %v882
        %v1061 = vpop.f32.mrb[0].mxu0
        %v1062 = vadd.f32 0.0, %v1061
        %v1063 = vpop.f32.mrb[0].mxu0
        %1064 = vmatprep.mubr.f32.mxu0 0.0
        %1065 = vmatmul.mubr.f32.gmra.mrb[0].mxu0 %v885
        %v1066 = vpop.f32.mrb[0].mxu0
        %v1067 = vadd.f32 0.0, %v1066
        %v1068 = vpop.f32.mrb[0].mxu0
        %1069 = vmatprep.mubr.f32.mxu0 0.0
        %1070 = vmatmul.mubr.f32.gmra.mrb[0].mxu0 %v888
        %v1071 = vpop.f32.mrb[0].mxu0
        %v1072 = vadd.f32 0.0, %v1071
        %v1073 = vpop.f32.mrb[0].mxu0
        %1074 = vmatprep.mubr.f32.mxu0 0.0
        %1075 = vmatmul.mubr.f32.gmra.mrb[0].mxu0 %v891
        %v1076 = vpop.f32.mrb[0].mxu0
        %v1077 = vadd.f32 0.0, %v1076
        %v1078 = vpop.f32.mrb[0].mxu0
        %1079 = vmatprep.mubr.f32.mxu0 0.0
        %1080 = vmatmul.mubr.f32.gmra.mrb[0].mxu0 %v894
        %v1081 = vpop.f32.mrb[0].mxu0
        %v1082 = vadd.f32 0.0, %v1081
        %v1083 = vpop.f32.mrb[0].mxu0
        %1084 = vmatprep.mubr.f32.mxu0 0.0
        %1085 = vmatmul.mubr.f32.gmra.mrb[0].mxu0 %v897
        %v1086 = vpop.f32.mrb[0].mxu0
        %v1087 = vadd.f32 0.0, %v1086
        %v1088 = vpop.f32.mrb[0].mxu0
        %1089 = vmatprep.mubr.f32.mxu0 0.0
        %1090 = vmatmul.mubr.f32.gmra.mrb[0].mxu0 %v900
        %v1091 = vpop.f32.mrb[0].mxu0
        %v1092 = vadd.f32 0.0, %v1091
        %v1093 = vpop.f32.mrb[0].mxu0
        %1094 = vmatprep.mubr.f32.mxu0 0.0
        %1095 = vmatmul.mubr.f32.gmra.mrb[0].mxu0 %v903
        %v1096 = vpop.f32.mrb[0].mxu0
        %v1097 = vadd.f32 0.0, %v1096
        %v1098 = vpop.f32.mrb[0].mxu0
        %1099 = vmatprep.mubr.f32.mxu0 0.0
        %1100 = vmatmul.mubr.f32.gmra.mrb[0].mxu0 %v906
        %v1101 = vpop.f32.mrb[0].mxu0
        %v1102 = vadd.f32 0.0, %v1101
        %v1103 = vpop.f32.mrb[0].mxu0
        %1104 = vmatprep.mubr.f32.mxu0 0.0
        %1105 = vmatmul.mubr.f32.gmra.mrb[0].mxu0 %v909
        %v1106 = vpop.f32.mrb[0].mxu0
        %v1107 = vadd.f32 0.0, %v1106
        %v1108 = vpop.f32.mrb[0].mxu0
        %1109 = vmatprep.mubr.f32.mxu0 0.0
        %1110 = vmatmul.mubr.f32.gmra.mrb[0].mxu0 %v912
        %v1111 = vpop.f32.mrb[0].mxu0
        %v1112 = vadd.f32 0.0, %v1111
        %v1113 = vpop.f32.mrb[0].mxu0
        %1114 = vmatprep.mubr.f32.mxu0 0.0
        %1115 = vmatmul.mubr.f32.gmra.mrb[0].mxu0 %v915
        %v1116 = vpop.f32.mrb[0].mxu0
        %v1117 = vadd.f32 0.0, %v1116
        %v1118 = vpop.f32.mrb[0].mxu0
        %1119 = vmatprep.mubr.f32.mxu0 0.0
        %1120 = vmatmul.mubr.f32.gmra.mrb[0].mxu0 %v918
        %v1121 = vpop.f32.mrb[0].mxu0
        %v1122 = vadd.f32 0.0, %v1121
        %v1123 = vpop.f32.mrb[0].mxu0
        %1124 = vmatprep.mubr.f32.mxu0 0.0
        %1125 = vmatmul.mubr.f32.gmra.mrb[0].mxu0 %v921
        %v1126 = vpop.f32.mrb[0].mxu0
        %v1127 = vadd.f32 0.0, %v1126
        %v1128 = vpop.f32.mrb[0].mxu0
        %1129 = vmatprep.mubr.f32.mxu0 0.0
        %1130 = vmatmul.mubr.f32.gmra.mrb[0].mxu0 %v924
        %v1131 = vpop.f32.mrb[0].mxu0
        %v1132 = vadd.f32 0.0, %v1131
        %v1133 = vpop.f32.mrb[0].mxu0
        %1134 = vmatprep.mubr.f32.mxu0 0.0
        %1135 = vmatmul.mubr.f32.gmra.mrb[0].mxu0 %v927
        %v1136 = vpop.f32.mrb[0].mxu0
        %v1137 = vadd.f32 0.0, %v1136
        %v1138 = vpop.f32.mrb[0].mxu0
        %1139 = vmatprep.mubr.f32.mxu0 0.0
        %1140 = vmatmul.mubr.f32.gmra.mrb[0].mxu0 %v930
        %v1141 = vpop.f32.mrb[0].mxu0
        %v1142 = vadd.f32 0.0, %v1141
        %v1143 = vpop.f32.mrb[0].mxu0
        %1144 = vmatprep.mubr.f32.mxu0 0.0
        %1145 = vmatmul.mubr.f32.gmra.mrb[0].mxu0 %v933
        %v1146 = vpop.f32.mrb[0].mxu0
        %v1147 = vadd.f32 0.0, %v1146
        %v1148 = vpop.f32.mrb[0].mxu0
        %1149 = vmatprep.mubr.f32.mxu0 0.0
        %1150 = vmatmul.mubr.f32.gmra.mrb[0].mxu0 %v936
        %v1151 = vpop.f32.mrb[0].mxu0
        %v1152 = vadd.f32 0.0, %v1151
        %v1153 = vpop.f32.mrb[0].mxu0
        %1154 = vmatprep.mubr.f32.mxu0 0.0
        %1155 = vmatmul.mubr.f32.gmra.mrb[0].mxu0 %v939
        %v1156 = vpop.f32.mrb[0].mxu0
        %v1157 = vadd.f32 0.0, %v1156
        %v1158 = vpop.f32.mrb[0].mxu0
        %1159 = vmatprep.mubr.f32.mxu0 0.0
        %1160 = vmatmul.mubr.f32.gmra.mrb[0].mxu0 %v942
        %v1161 = vpop.f32.mrb[0].mxu0
        %v1162 = vadd.f32 0.0, %v1161
        %v1163 = vpop.f32.mrb[0].mxu0
        %1164 = vmatprep.mubr.f32.mxu0 0.0
        %1165 = vmatmul.mubr.f32.gmra.mrb[0].mxu0 %v945
        %v1166 = vpop.f32.mrb[0].mxu0
        %v1167 = vadd.f32 0.0, %v1166
        %v1168 = vpop.f32.mrb[0].mxu0
        %1169 = vmatprep.mubr.f32.mxu0 0.0
        %1170 = vmatmul.mubr.f32.gmra.mrb[0].mxu0 %v948
        %v1171 = vpop.f32.mrb[0].mxu0
        %v1172 = vadd.f32 0.0, %v1171
        %v1173 = vpop.f32.mrb[0].mxu0
        %1174 = vdwg.mxu0
        %vm1175 = vcmask 130048
        %1176 = vst.msk [vmem:[%s172] sm:$0xff] %vm1175, %v1017
        %1177 = vst.msk [vmem:[%s172 + $0x8] sm:$0xff] %vm1175, %v1022
        %1178 = vst.msk [vmem:[%s172 + $0x10] sm:$0xff] %vm1175, %v1027
        %1179 = vst.msk [vmem:[%s172 + $0x18] sm:$0xff] %vm1175, %v1032
        %1180 = vst.msk [vmem:[%s172 + $0x20] sm:$0xff] %vm1175, %v1037
        %1181 = vst.msk [vmem:[%s172 + $0x28] sm:$0xff] %vm1175, %v1042
        %1182 = vst.msk [vmem:[%s172 + $0x30] sm:$0xff] %vm1175, %v1047
        %1183 = vst.msk [vmem:[%s172 + $0x38] sm:$0xff] %vm1175, %v1052
        %1184 = vst.msk [vmem:[%s172 + $0x40] sm:$0xff] %vm1175, %v1057
        %1185 = vst.msk [vmem:[%s172 + $0x48] sm:$0xff] %vm1175, %v1062
        %1186 = vst.msk [vmem:[%s172 + $0x50] sm:$0xff] %vm1175, %v1067
        %1187 = vst.msk [vmem:[%s172 + $0x58] sm:$0xff] %vm1175, %v1072
        %1188 = vst.msk [vmem:[%s172 + $0x60] sm:$0xff] %vm1175, %v1077
        %1189 = vst.msk [vmem:[%s172 + $0x68] sm:$0xff] %vm1175, %v1082
        %1190 = vst.msk [vmem:[%s172 + $0x70] sm:$0xff] %vm1175, %v1087
        %1191 = vst.msk [vmem:[%s172 + $0x78] sm:$0xff] %vm1175, %v1092
        %1192 = vst.msk [vmem:[%s172 + $0x80] sm:$0xff] %vm1175, %v1097
        %1193 = vst.msk [vmem:[%s172 + $0x88] sm:$0xff] %vm1175, %v1102
        %1194 = vst.msk [vmem:[%s172 + $0x90] sm:$0xff] %vm1175, %v1107
        %1195 = vst.msk [vmem:[%s172 + $0x98] sm:$0xff] %vm1175, %v1112
        %1196 = vst.msk [vmem:[%s172 + $0xa0] sm:$0xff] %vm1175, %v1117
        %1197 = vst.msk [vmem:[%s172 + $0xa8] sm:$0xff] %vm1175, %v1122
        %1198 = vst.msk [vmem:[%s172 + $0xb0] sm:$0xff] %vm1175, %v1127
        %1199 = vst.msk [vmem:[%s172 + $0xb8] sm:$0xff] %vm1175, %v1132
        %1200 = vst.msk [vmem:[%s172 + $0xc0] sm:$0xff] %vm1175, %v1137
        %1201 = vst.msk [vmem:[%s172 + $0xc8] sm:$0xff] %vm1175, %v1142
        %1202 = vst.msk [vmem:[%s172 + $0xd0] sm:$0xff] %vm1175, %v1147
        %1203 = vst.msk [vmem:[%s172 + $0xd8] sm:$0xff] %vm1175, %v1152
        %1204 = vst.msk [vmem:[%s172 + $0xe0] sm:$0xff] %vm1175, %v1157
        %1205 = vst.msk [vmem:[%s172 + $0xe8] sm:$0xff] %vm1175, %v1162
        %1206 = vst.msk [vmem:[%s172 + $0xf0] sm:$0xff] %vm1175, %v1167
        %1207 = vst.msk [vmem:[%s172 + $0xf8] sm:$0xff] %vm1175, %v1172
        %s1208 = sand.u32 %s90, 1
        %s1209 = sand.u32 %s90, 1
        %s1210 = smul.addr %s1209, 256
        %s1211 = scalar_lea.vmem [#allocation2], %s1210
        // Predicated region
        $region33: #{tpu_custom_call.1} parent=31 // pred_check
          %p1212 = pneg %p100
        $region34: #{tpu_custom_call.1} parent=31 // pred_check_branch
          %1214 = sbr.rel (%p1212) target = $region36
        $region35: #{tpu_custom_call.1} parent=31 // pred_region
          %s1215 = smul.u32 32, %s14
          %s1216 = ssub.s32 38, %s1215
          %p1217 = scmp.lt.s32.totalorder %s1216, 32
          %s1218 = scalar_select %p1217, %s1216, 32
          %s1219 = smul.u32 128, %s1218
          %p1220 = scmp.ne.s32.totalorder 0, %s1219
          %s1221 = smul.addr %s1215, 8
          %s1222 = scalar_lea.vmem %s3, %s1221
          // Predicated region
          $region37: #{tpu_custom_call.1} parent=35 // pred_check
            %p1223 = pneg %p1220
          $region38: #{tpu_custom_call.1} parent=35 // pred_check_branch
            %1225 = sbr.rel (%p1223) target = $region40
          $region39: #{tpu_custom_call.1} parent=35 // pred_region
            // Predicated region
            $region41: #{tpu_custom_call.1} parent=39 // pred_check
              _
            $region42: #{tpu_custom_call.1} parent=39 // pred_check_branch
              %1227 = sbr.rel (0) target = $region44
            $region43: #{tpu_custom_call.1} parent=39 // pred_region
              // Predicated region
              $region63: #{tpu_custom_call.1} parent=43 // pred_check
                _
              $region64: #{tpu_custom_call.1} parent=43 // pred_check_branch
                %1338 = sbr.rel (0) target = $region66
              $region65: #{tpu_custom_call.1} parent=43 // pred_region
                %s1339 = sshrl.u32 %s1218, 5
                // While loop
                $region67: #{tpu_custom_call.1} parent=65 // loop_pre_header
                  _
                $region68: #{tpu_custom_call.1} parent=65 // loop_header
                  %s1341 = sphi 0, %s1343
                  %p1342 = scmp.ge.s32.totalorder %s1341, %s1339
                  %s1346 = sphi 0, %s1415
                  %s1347 = sphi %s1211, %s1418
                  %s1348 = sphi %s1222, %s1419
                $region69: #{tpu_custom_call.1} parent=65 // loop_header_branch
                  %1345 = sbr.rel (%p1342) target = $region73
                $region70: #{tpu_custom_call.1} parent=65 // loop_body
                  %v1349 = vld [vmem:[%s1347] sm:$0xff]
                  %1350 = vst [vmem:[%s1348] sm:$0xff] %v1349
                  %v1351 = vld [vmem:[%s1347 + $0x8] sm:$0xff]
                  %1352 = vst [vmem:[%s1348 + $0x8] sm:$0xff] %v1351
                  %v1353 = vld [vmem:[%s1347 + $0x10] sm:$0xff]
                  %1354 = vst [vmem:[%s1348 + $0x10] sm:$0xff] %v1353
                  %v1355 = vld [vmem:[%s1347 + $0x18] sm:$0xff]
                  %1356 = vst [vmem:[%s1348 + $0x18] sm:$0xff] %v1355
                  %v1357 = vld [vmem:[%s1347 + $0x20] sm:$0xff]
                  %1358 = vst [vmem:[%s1348 + $0x20] sm:$0xff] %v1357
                  %v1359 = vld [vmem:[%s1347 + $0x28] sm:$0xff]
                  %1360 = vst [vmem:[%s1348 + $0x28] sm:$0xff] %v1359
                  %v1361 = vld [vmem:[%s1347 + $0x30] sm:$0xff]
                  %1362 = vst [vmem:[%s1348 + $0x30] sm:$0xff] %v1361
                  %v1363 = vld [vmem:[%s1347 + $0x38] sm:$0xff]
                  %1364 = vst [vmem:[%s1348 + $0x38] sm:$0xff] %v1363
                  %v1365 = vld [vmem:[%s1347 + $0x40] sm:$0xff]
                  %1366 = vst [vmem:[%s1348 + $0x40] sm:$0xff] %v1365
                  %v1367 = vld [vmem:[%s1347 + $0x48] sm:$0xff]
                  %1368 = vst [vmem:[%s1348 + $0x48] sm:$0xff] %v1367
                  %v1369 = vld [vmem:[%s1347 + $0x50] sm:$0xff]
                  %1370 = vst [vmem:[%s1348 + $0x50] sm:$0xff] %v1369
                  %v1371 = vld [vmem:[%s1347 + $0x58] sm:$0xff]
                  %1372 = vst [vmem:[%s1348 + $0x58] sm:$0xff] %v1371
                  %v1373 = vld [vmem:[%s1347 + $0x60] sm:$0xff]
                  %1374 = vst [vmem:[%s1348 + $0x60] sm:$0xff] %v1373
                  %v1375 = vld [vmem:[%s1347 + $0x68] sm:$0xff]
                  %1376 = vst [vmem:[%s1348 + $0x68] sm:$0xff] %v1375
                  %v1377 = vld [vmem:[%s1347 + $0x70] sm:$0xff]
                  %1378 = vst [vmem:[%s1348 + $0x70] sm:$0xff] %v1377
                  %v1379 = vld [vmem:[%s1347 + $0x78] sm:$0xff]
                  %1380 = vst [vmem:[%s1348 + $0x78] sm:$0xff] %v1379
                  %v1381 = vld [vmem:[%s1347 + $0x80] sm:$0xff]
                  %1382 = vst [vmem:[%s1348 + $0x80] sm:$0xff] %v1381
                  %v1383 = vld [vmem:[%s1347 + $0x88] sm:$0xff]
                  %1384 = vst [vmem:[%s1348 + $0x88] sm:$0xff] %v1383
                  %v1385 = vld [vmem:[%s1347 + $0x90] sm:$0xff]
                  %1386 = vst [vmem:[%s1348 + $0x90] sm:$0xff] %v1385
                  %v1387 = vld [vmem:[%s1347 + $0x98] sm:$0xff]
                  %1388 = vst [vmem:[%s1348 + $0x98] sm:$0xff] %v1387
                  %v1389 = vld [vmem:[%s1347 + $0xa0] sm:$0xff]
                  %1390 = vst [vmem:[%s1348 + $0xa0] sm:$0xff] %v1389
                  %v1391 = vld [vmem:[%s1347 + $0xa8] sm:$0xff]
                  %1392 = vst [vmem:[%s1348 + $0xa8] sm:$0xff] %v1391
                  %v1393 = vld [vmem:[%s1347 + $0xb0] sm:$0xff]
                  %1394 = vst [vmem:[%s1348 + $0xb0] sm:$0xff] %v1393
                  %v1395 = vld [vmem:[%s1347 + $0xb8] sm:$0xff]
                  %1396 = vst [vmem:[%s1348 + $0xb8] sm:$0xff] %v1395
                  %v1397 = vld [vmem:[%s1347 + $0xc0] sm:$0xff]
                  %1398 = vst [vmem:[%s1348 + $0xc0] sm:$0xff] %v1397
                  %v1399 = vld [vmem:[%s1347 + $0xc8] sm:$0xff]
                  %1400 = vst [vmem:[%s1348 + $0xc8] sm:$0xff] %v1399
                  %v1401 = vld [vmem:[%s1347 + $0xd0] sm:$0xff]
                  %1402 = vst [vmem:[%s1348 + $0xd0] sm:$0xff] %v1401
                  %v1403 = vld [vmem:[%s1347 + $0xd8] sm:$0xff]
                  %1404 = vst [vmem:[%s1348 + $0xd8] sm:$0xff] %v1403
                  %v1405 = vld [vmem:[%s1347 + $0xe0] sm:$0xff]
                  %1406 = vst [vmem:[%s1348 + $0xe0] sm:$0xff] %v1405
                  %v1407 = vld [vmem:[%s1347 + $0xe8] sm:$0xff]
                  %1408 = vst [vmem:[%s1348 + $0xe8] sm:$0xff] %v1407
                  %v1409 = vld [vmem:[%s1347 + $0xf0] sm:$0xff]
                  %1410 = vst [vmem:[%s1348 + $0xf0] sm:$0xff] %v1409
                  %v1411 = vld [vmem:[%s1347 + $0xf8] sm:$0xff]
                  %1412 = vst [vmem:[%s1348 + $0xf8] sm:$0xff] %v1411
                  %s1413 = sadd.s32 1, %s1346
                  %p1414 = scmp.ge.s32.totalorder %s1413, %s1339
                  %s1415 = scalar_select %p1414, 0, %s1413
                  %s1416 = smul.u32 %s1415, 256
                  %s1417 = smul.u32 %s1415, 256
                  %s1418 = scalar_lea.vmem %s1211, %s1416 [#allocation2]
                  %s1419 = scalar_lea.vmem %s1222, %s1417
                $region71: #{tpu_custom_call.1} parent=65 // loop_footer
                  %s1343 = sadd.s32 %s1341, 1
                $region72: #{tpu_custom_call.1} parent=65 // loop_footer_branch
                  %1340 = sbr.rel target = $region68
                $region73: #{tpu_custom_call.1} parent=65 // loop_exit
                  _
                %s1420 = sshrl.u32 %s1218, 5
                %s1421 = sand.u32 %s1218, 31
                %s1422 = smul.u32 %s1420, 32
                %s1423 = smul.u32 8, %s1422
                %s1424 = scalar_lea.vmem %s1211, %s1423 [#allocation2]
                %s1425 = smul.u32 8, %s1422
                %s1426 = scalar_lea.vmem %s1222, %s1425
                // While loop
                $region74: #{tpu_custom_call.1} parent=65 // loop_pre_header
                  _
                $region75: #{tpu_custom_call.1} parent=65 // loop_header
                  %s1428 = sphi 0, %s1430
                  %p1429 = scmp.ge.s32.totalorder %s1428, %s1421
                  %s1433 = sphi 0, %s1440
                  %s1434 = sphi %s1424, %s1443
                  %s1435 = sphi %s1426, %s1444
                $region76: #{tpu_custom_call.1} parent=65 // loop_header_branch
                  %1432 = sbr.rel (%p1429) target = $region80
                $region77: #{tpu_custom_call.1} parent=65 // loop_body
                  %v1436 = vld [vmem:[%s1434] sm:$0xff]
                  %1437 = vst [vmem:[%s1435] sm:$0xff] %v1436
                  %s1438 = sadd.s32 1, %s1433
                  %p1439 = scmp.ge.s32.totalorder %s1438, %s1421
                  %s1440 = scalar_select %p1439, 0, %s1438
                  %s1441 = smul.u32 %s1440, 8
                  %s1442 = smul.u32 %s1440, 8
                  %s1443 = scalar_lea.vmem %s1424, %s1441 [#allocation2]
                  %s1444 = scalar_lea.vmem %s1426, %s1442
                $region78: #{tpu_custom_call.1} parent=65 // loop_footer
                  %s1430 = sadd.s32 %s1428, 1
                $region79: #{tpu_custom_call.1} parent=65 // loop_footer_branch
                  %1427 = sbr.rel target = $region75
                $region80: #{tpu_custom_call.1} parent=65 // loop_exit
                  _
              $region66: #{tpu_custom_call.1} parent=43 // pred_fallthru
                _
              // Predicated region
              $region81: #{tpu_custom_call.1} parent=43 // pred_check
                _
              $region82: #{tpu_custom_call.1} parent=43 // pred_check_branch
                %1446 = sbr.rel target = $region84
              $region83: #{tpu_custom_call.1} parent=43 // pred_region
                _
              $region84: #{tpu_custom_call.1} parent=43 // pred_fallthru
                _
            $region44: #{tpu_custom_call.1} parent=39 // pred_fallthru
              _
            // Predicated region
            $region45: #{tpu_custom_call.1} parent=39 // pred_check
              _
            $region46: #{tpu_custom_call.1} parent=39 // pred_check_branch
              %1229 = sbr.rel target = $region48
            $region47: #{tpu_custom_call.1} parent=39 // pred_region
              %s1231 = sshrl.u32 %s1218, 5
              // While loop
              $region49: #{tpu_custom_call.1} parent=47 // loop_pre_header
                _
              $region50: #{tpu_custom_call.1} parent=47 // loop_header
                %s1233 = sphi 0, %s1235
                %p1234 = scmp.ge.s32.totalorder %s1233, %s1231
                %s1238 = sphi 0, %s1307
                %s1239 = sphi %s1211, %s1310
                %s1240 = sphi %s1222, %s1311
              $region51: #{tpu_custom_call.1} parent=47 // loop_header_branch
                %1237 = sbr.rel (%p1234) target = $region55
              $region52: #{tpu_custom_call.1} parent=47 // loop_body
                %v1241 = vld [vmem:[%s1239] sm:$0xff]
                %1242 = vst [vmem:[%s1240] sm:$0xff] %v1241
                %v1243 = vld [vmem:[%s1239 + $0x8] sm:$0xff]
                %1244 = vst [vmem:[%s1240 + $0x8] sm:$0xff] %v1243
                %v1245 = vld [vmem:[%s1239 + $0x10] sm:$0xff]
                %1246 = vst [vmem:[%s1240 + $0x10] sm:$0xff] %v1245
                %v1247 = vld [vmem:[%s1239 + $0x18] sm:$0xff]
                %1248 = vst [vmem:[%s1240 + $0x18] sm:$0xff] %v1247
                %v1249 = vld [vmem:[%s1239 + $0x20] sm:$0xff]
                %1250 = vst [vmem:[%s1240 + $0x20] sm:$0xff] %v1249
                %v1251 = vld [vmem:[%s1239 + $0x28] sm:$0xff]
                %1252 = vst [vmem:[%s1240 + $0x28] sm:$0xff] %v1251
                %v1253 = vld [vmem:[%s1239 + $0x30] sm:$0xff]
                %1254 = vst [vmem:[%s1240 + $0x30] sm:$0xff] %v1253
                %v1255 = vld [vmem:[%s1239 + $0x38] sm:$0xff]
                %1256 = vst [vmem:[%s1240 + $0x38] sm:$0xff] %v1255
                %v1257 = vld [vmem:[%s1239 + $0x40] sm:$0xff]
                %1258 = vst [vmem:[%s1240 + $0x40] sm:$0xff] %v1257
                %v1259 = vld [vmem:[%s1239 + $0x48] sm:$0xff]
                %1260 = vst [vmem:[%s1240 + $0x48] sm:$0xff] %v1259
                %v1261 = vld [vmem:[%s1239 + $0x50] sm:$0xff]
                %1262 = vst [vmem:[%s1240 + $0x50] sm:$0xff] %v1261
                %v1263 = vld [vmem:[%s1239 + $0x58] sm:$0xff]
                %1264 = vst [vmem:[%s1240 + $0x58] sm:$0xff] %v1263
                %v1265 = vld [vmem:[%s1239 + $0x60] sm:$0xff]
                %1266 = vst [vmem:[%s1240 + $0x60] sm:$0xff] %v1265
                %v1267 = vld [vmem:[%s1239 + $0x68] sm:$0xff]
                %1268 = vst [vmem:[%s1240 + $0x68] sm:$0xff] %v1267
                %v1269 = vld [vmem:[%s1239 + $0x70] sm:$0xff]
                %1270 = vst [vmem:[%s1240 + $0x70] sm:$0xff] %v1269
                %v1271 = vld [vmem:[%s1239 + $0x78] sm:$0xff]
                %1272 = vst [vmem:[%s1240 + $0x78] sm:$0xff] %v1271
                %v1273 = vld [vmem:[%s1239 + $0x80] sm:$0xff]
                %1274 = vst [vmem:[%s1240 + $0x80] sm:$0xff] %v1273
                %v1275 = vld [vmem:[%s1239 + $0x88] sm:$0xff]
                %1276 = vst [vmem:[%s1240 + $0x88] sm:$0xff] %v1275
                %v1277 = vld [vmem:[%s1239 + $0x90] sm:$0xff]
                %1278 = vst [vmem:[%s1240 + $0x90] sm:$0xff] %v1277
                %v1279 = vld [vmem:[%s1239 + $0x98] sm:$0xff]
                %1280 = vst [vmem:[%s1240 + $0x98] sm:$0xff] %v1279
                %v1281 = vld [vmem:[%s1239 + $0xa0] sm:$0xff]
                %1282 = vst [vmem:[%s1240 + $0xa0] sm:$0xff] %v1281
                %v1283 = vld [vmem:[%s1239 + $0xa8] sm:$0xff]
                %1284 = vst [vmem:[%s1240 + $0xa8] sm:$0xff] %v1283
                %v1285 = vld [vmem:[%s1239 + $0xb0] sm:$0xff]
                %1286 = vst [vmem:[%s1240 + $0xb0] sm:$0xff] %v1285
                %v1287 = vld [vmem:[%s1239 + $0xb8] sm:$0xff]
                %1288 = vst [vmem:[%s1240 + $0xb8] sm:$0xff] %v1287
                %v1289 = vld [vmem:[%s1239 + $0xc0] sm:$0xff]
                %1290 = vst [vmem:[%s1240 + $0xc0] sm:$0xff] %v1289
                %v1291 = vld [vmem:[%s1239 + $0xc8] sm:$0xff]
                %1292 = vst [vmem:[%s1240 + $0xc8] sm:$0xff] %v1291
                %v1293 = vld [vmem:[%s1239 + $0xd0] sm:$0xff]
                %1294 = vst [vmem:[%s1240 + $0xd0] sm:$0xff] %v1293
                %v1295 = vld [vmem:[%s1239 + $0xd8] sm:$0xff]
                %1296 = vst [vmem:[%s1240 + $0xd8] sm:$0xff] %v1295
                %v1297 = vld [vmem:[%s1239 + $0xe0] sm:$0xff]
                %1298 = vst [vmem:[%s1240 + $0xe0] sm:$0xff] %v1297
                %v1299 = vld [vmem:[%s1239 + $0xe8] sm:$0xff]
                %1300 = vst [vmem:[%s1240 + $0xe8] sm:$0xff] %v1299
                %v1301 = vld [vmem:[%s1239 + $0xf0] sm:$0xff]
                %1302 = vst [vmem:[%s1240 + $0xf0] sm:$0xff] %v1301
                %v1303 = vld [vmem:[%s1239 + $0xf8] sm:$0xff]
                %1304 = vst [vmem:[%s1240 + $0xf8] sm:$0xff] %v1303
                %s1305 = sadd.s32 1, %s1238
                %p1306 = scmp.ge.s32.totalorder %s1305, %s1231
                %s1307 = scalar_select %p1306, 0, %s1305
                %s1308 = smul.u32 %s1307, 256
                %s1309 = smul.u32 %s1307, 256
                %s1310 = scalar_lea.vmem %s1211, %s1308 [#allocation2]
                %s1311 = scalar_lea.vmem %s1222, %s1309
              $region53: #{tpu_custom_call.1} parent=47 // loop_footer
                %s1235 = sadd.s32 %s1233, 1
              $region54: #{tpu_custom_call.1} parent=47 // loop_footer_branch
                %1232 = sbr.rel target = $region50
              $region55: #{tpu_custom_call.1} parent=47 // loop_exit
                _
              %s1312 = sshrl.u32 %s1218, 5
              %s1313 = sand.u32 %s1218, 31
              %s1314 = smul.u32 %s1312, 32
              %s1315 = smul.u32 8, %s1314
              %s1316 = scalar_lea.vmem %s1211, %s1315 [#allocation2]
              %s1317 = smul.u32 8, %s1314
              %s1318 = scalar_lea.vmem %s1222, %s1317
              // While loop
              $region56: #{tpu_custom_call.1} parent=47 // loop_pre_header
                _
              $region57: #{tpu_custom_call.1} parent=47 // loop_header
                %s1320 = sphi 0, %s1322
                %p1321 = scmp.ge.s32.totalorder %s1320, %s1313
                %s1325 = sphi 0, %s1332
                %s1326 = sphi %s1316, %s1335
                %s1327 = sphi %s1318, %s1336
              $region58: #{tpu_custom_call.1} parent=47 // loop_header_branch
                %1324 = sbr.rel (%p1321) target = $region62
              $region59: #{tpu_custom_call.1} parent=47 // loop_body
                %v1328 = vld [vmem:[%s1326] sm:$0xff]
                %1329 = vst [vmem:[%s1327] sm:$0xff] %v1328
                %s1330 = sadd.s32 1, %s1325
                %p1331 = scmp.ge.s32.totalorder %s1330, %s1313
                %s1332 = scalar_select %p1331, 0, %s1330
                %s1333 = smul.u32 %s1332, 8
                %s1334 = smul.u32 %s1332, 8
                %s1335 = scalar_lea.vmem %s1316, %s1333 [#allocation2]
                %s1336 = scalar_lea.vmem %s1318, %s1334
              $region60: #{tpu_custom_call.1} parent=47 // loop_footer
                %s1322 = sadd.s32 %s1320, 1
              $region61: #{tpu_custom_call.1} parent=47 // loop_footer_branch
                %1319 = sbr.rel target = $region57
              $region62: #{tpu_custom_call.1} parent=47 // loop_exit
                _
            $region48: #{tpu_custom_call.1} parent=39 // pred_fallthru
              _
          $region40: #{tpu_custom_call.1} parent=35 // pred_fallthru
            _
          %1447 = vnop
        $region36: #{tpu_custom_call.1} parent=31 // pred_fallthru
          _
      $region32: #{tpu_custom_call.1} parent=5 // pred_fallthru
        _
      %p1448 = scmp.le.s32.totalorder 2, %s9
      // Predicated region
      $region85: #{tpu_custom_call.1} parent=5 // pred_check
        %p1449 = pneg %p1448
      $region86: #{tpu_custom_call.1} parent=5 // pred_check_branch
        %1451 = sbr.rel (%p1449) target = $region88
      $region87: #{tpu_custom_call.1} parent=5 // pred_region
        %s1452 = ssub.s32 %s9, 2
        // Predicated region
        $region89: #{tpu_custom_call.1} parent=87 // pred_check
          %p1453 = pneg %p106
        $region90: #{tpu_custom_call.1} parent=87 // pred_check_branch
          %1455 = sbr.rel (%p1453) target = $region92
        $region91: #{tpu_custom_call.1} parent=87 // pred_region
          %s1456 = sand.u32 %s91, 1
          %s1457 = sand.u32 %s91, 1
          %s1458 = smul.addr %s1457, 256
          %s1459 = scalar_lea.vmem [#allocation2], %s1458
        $region92: #{tpu_custom_call.1} parent=87 // pred_fallthru
          _
      $region88: #{tpu_custom_call.1} parent=5 // pred_fallthru
        _
    $region6: #{tpu_custom_call.1} parent=1 // loop_footer
      %s13 = sadd.s32 1, %s9
    $region7: #{tpu_custom_call.1} parent=1 // loop_footer_branch
      %8 = sbr.rel target = $region3
    $region8: #{tpu_custom_call.1} parent=1 // loop_exit
      _

</llo_original>
